<compile_context>
chip_gen: v7x
topology: tpu7x:2x2x1
jax: 0.10.0
libtpu: 0.0.40
codegen_flags: <defaults>
</compile_context>

<pallas_src>
import jax
import jax.numpy as jnp
from jax import lax
from jax.experimental import pallas as pl
from jax.experimental.pallas import tpu as pltpu


def _round_up(x, m):
    return (x + m - 1) // m * m


def _cdiv(a, b):
    return -(-a // b)


def _discriminator_kernel(x_ref, w1_ref, w2_ref, wb_ref, o_ref):
    """One batch tile. Activations are [features, batch] so the lane axis = batch."""
    x = x_ref[...]                      # (TILE_B, K) f32, streamed (natural layout)
    xb = x.astype(jnp.bfloat16)         # cast in-kernel; MXU operands only
    w1 = w1_ref[...]                    # (H, K) bf16, resident (PyTorch [out, in])
    w2 = w2_ref[...]                    # (H, H) bf16, resident
    wb = wb_ref[...]                    # (H, 4) f32, resident: [w3 | b1 | b2 | b3]

    w3_col = wb[:, 0:1]                 # (H, 1)
    b1_col = wb[:, 1:2]                 # (H, 1)
    b2_col = wb[:, 2:3]                 # (H, 1)
    b3 = wb[0:1, 3:4]                   # (1, 1)

    # fc1 + relu : contract on x's last dim -> (H, TILE_B), f32 accumulation on MXU.
    h1 = lax.dot_general(
        w1, xb, dimension_numbers=(((1,), (1,)), ((), ())),
        preferred_element_type=jnp.float32) + b1_col
    h1 = jnp.maximum(h1, 0.0)

    # fc2 + relu : (H, H) @ (H, TILE_B) -> (H, TILE_B)
    h2 = jnp.dot(w2, h1.astype(jnp.bfloat16),
                 preferred_element_type=jnp.float32) + b2_col
    h2 = jnp.maximum(h2, 0.0)

    # fc3 + sigmoid : 1-wide contraction as VPU multiply + sublane reduce,
    # producing a lane-dense (1, TILE_B) row (unmasked vst on writeback).
    logits = jnp.sum(h2 * w3_col, axis=0, keepdims=True) + b3
    o_ref[...] = jax.nn.sigmoid(logits).astype(o_ref.dtype)


def discriminator_forward(x, params, *, tile_b=16384):
    """x: [B, num_inputs] float32. params use PyTorch layout (W: [out, in])."""
    w1, b1 = params["w1"], params["b1"]   # (H, K), (H,)
    w2, b2 = params["w2"], params["b2"]   # (H, H), (H,)
    w3, b3 = params["w3"], params["b3"]   # (1, H), (1,)

    B, K = x.shape
    H = w1.shape[0]

    lane = 128
    b_lanes = _round_up(B, lane)          # minimal lane-padded batch

    # Tile selection:
    #  * lane-dense (multiple of 128), as large as possible (step overhead ~0.35us)
    #  * capped at 32768 so f32 intermediates + double-buffered x/out fit the
    #    32 MiB scoped-VMEM default on v7x (comfortable on v5e/v6e's 128 MiB).
    tile_b = max(lane, min(int(tile_b), 32768, b_lanes))
    tile_b = _round_up(tile_b, lane)

    grid_n = _cdiv(b_lanes, tile_b)
    # v7x megacore: keep >= 2 grid steps whenever the batch has >= 2 lane tiles,
    # so the "parallel" grid axis can shard across both TensorCores.
    if b_lanes >= 2 * lane:
        grid_n = max(grid_n, 2)
    # Rebalance the tile so the padded batch (grid_n * tile_b) stays minimal.
    tile_b = _round_up(_cdiv(b_lanes, grid_n), lane)
    grid_n = _cdiv(b_lanes, tile_b)
    b_pad = grid_n * tile_b

    # x stays f32 in its natural [B, K] layout; only pad rows if needed.
    x_in = x if b_pad == B else jnp.pad(x, ((0, b_pad - B), (0, 0)))

    # Tiny weights: cast matmul operands to bf16 once; pack fc3 weight + all
    # biases into one small resident f32 buffer (7 operands -> 4).
    w1b = w1.astype(jnp.bfloat16)
    w2b = w2.astype(jnp.bfloat16)
    wb = jnp.stack(
        [w3[0].astype(jnp.float32),
         b1.astype(jnp.float32),
         b2.astype(jnp.float32),
         jnp.full((H,), b3[0], jnp.float32)],
        axis=1)                                                        # (H, 4)

    cost = pl.CostEstimate(
        flops=2 * b_pad * (K * H + H * H + H),
        transcendentals=b_pad,
        bytes_accessed=(x_in.size * 4) + (b_pad * 4)
        + (w1b.size * 2) + (w2b.size * 2) + (wb.size * 4),
    )

    out = pl.pallas_call(
        _discriminator_kernel,
        out_shape=jax.ShapeDtypeStruct((1, b_pad), jnp.float32),
        grid=(grid_n,),
        in_specs=[
            pl.BlockSpec((tile_b, K), lambda i: (i, 0)),   # x tile, streamed
            pl.BlockSpec((H, K), lambda i: (0, 0)),        # fc1 weight, resident
            pl.BlockSpec((H, H), lambda i: (0, 0)),        # fc2 weight, resident
            pl.BlockSpec((H, 4), lambda i: (0, 0)),        # packed fc3 w + biases
        ],
        out_specs=pl.BlockSpec((1, tile_b), lambda i: (0, i)),  # lane-dense out
        compiler_params=pltpu.CompilerParams(
            dimension_semantics=("parallel",)),
        cost_estimate=cost,
    )(x_in, w1b, w2b, wb)

    return out[0, :B].reshape(B, 1)


def init_params(key, num_inputs, hidden_size):
    """nn.Linear-style init (uniform +/- 1/sqrt(fan_in)), PyTorch [out, in] layout."""
    def linear(k, fan_in, fan_out):
        kw, kb = jax.random.split(k)
        bound = 1.0 / jnp.sqrt(fan_in)
        w = jax.random.uniform(kw, (fan_out, fan_in), jnp.float32, -bound, bound)
        b = jax.random.uniform(kb, (fan_out,), jnp.float32, -bound, bound)
        return w, b

    k1, k2, k3 = jax.random.split(key, 3)
    w1, b1 = linear(k1, num_inputs, hidden_size)
    w2, b2 = linear(k2, hidden_size, hidden_size)
    w3, b3 = linear(k3, hidden_size, 1)
    return {"w1": w1, "b1": b1, "w2": w2, "b2": b2, "w3": w3, "b3": b3}


def _reference_forward(x, p):
    h1 = jnp.maximum(x @ p["w1"].T + p["b1"], 0.0)
    h2 = jnp.maximum(h1 @ p["w2"].T + p["b2"], 0.0)
    return jax.nn.sigmoid(h2 @ p["w3"].T + p["b3"])


if __name__ == "__main__":
    key = jax.random.PRNGKey(0)
    k_param, k_x, k_x2 = jax.random.split(key, 3)

    batch = 8
    num_inputs = 16   # e.g. state_dim + action_dim
    hidden_size = 32  # args.hidden_size

    params = init_params(k_param, num_inputs, hidden_size)

    # Small single-tile case (grid = 1).
    x = jax.random.normal(k_x, (batch, num_inputs), jnp.float32)
    prob = jax.block_until_ready(discriminator_forward(x, params))
    ref = _reference_forward(x, params)
    assert prob.shape == (batch, 1)
    # bf16 matmul inputs -> relaxed tolerance vs f32 reference.
    assert jnp.allclose(prob, ref, atol=2e-2, rtol=2e-2), float(
        jnp.max(jnp.abs(prob - ref)))

    # Multi-tile case (exercises padding + >= 2 grid steps / megacore path).
    batch2 = 300
    x2 = jax.random.normal(k_x2, (batch2, num_inputs), jnp.float32)
    prob2 = jax.block_until_ready(discriminator_forward(x2, params))
    ref2 = _reference_forward(x2, params)
    assert prob2.shape == (batch2, 1)
    assert jnp.allclose(prob2, ref2, atol=2e-2, rtol=2e-2), float(
        jnp.max(jnp.abs(prob2 - ref2)))

    print("KERNEL_OK")
</pallas_src>

<mosaic_0001>
module attributes {stable_mosaic.version = 11 : i64} {
  func.func @_discriminator_kernel(%arg0: i32, %arg1: memref<128x16xf32, #tpu.memory_space<vmem>>, %arg2: memref<32x16xbf16, #tpu.memory_space<vmem>>, %arg3: memref<32x32xbf16, #tpu.memory_space<vmem>>, %arg4: memref<32x4xf32, #tpu.memory_space<vmem>>, %arg5: memref<1x128xf32, #tpu.memory_space<vmem>>) attributes {dimension_semantics = [#tpu.dimension_semantics<parallel>], iteration_bounds = array<i64: 1>, scalar_prefetch = 0 : i64, scratch_operands = 0 : i64, tpu.core_type = #tpu.core_type<tc>, window_params = [{transform_indices = @transform_0, window_bounds = array<i64: 128, 16>}, {pipeline_mode = #tpu.pipeline_mode<synchronous>, transform_indices = @transform_1, window_bounds = array<i64: 32, 16>}, {pipeline_mode = #tpu.pipeline_mode<synchronous>, transform_indices = @transform_2, window_bounds = array<i64: 32, 32>}, {pipeline_mode = #tpu.pipeline_mode<synchronous>, transform_indices = @transform_3, window_bounds = array<i64: 32, 4>}, {transform_indices = @transform_4, window_bounds = array<i64: 1, 128>}]} {
    %c0 = arith.constant 0 : index
    %c0_0 = arith.constant 0 : index
    %0 = vector.load %arg1[%c0, %c0_0] : memref<128x16xf32, #tpu.memory_space<vmem>>, vector<128x16xf32>
    %1 = arith.truncf %0 : vector<128x16xf32> to vector<128x16xbf16>
    %c0_1 = arith.constant 0 : index
    %c0_2 = arith.constant 0 : index
    %2 = vector.load %arg2[%c0_1, %c0_2] : memref<32x16xbf16, #tpu.memory_space<vmem>>, vector<32x16xbf16>
    %c0_3 = arith.constant 0 : index
    %c0_4 = arith.constant 0 : index
    %3 = vector.load %arg3[%c0_3, %c0_4] : memref<32x32xbf16, #tpu.memory_space<vmem>>, vector<32x32xbf16>
    %c0_5 = arith.constant 0 : index
    %c0_6 = arith.constant 0 : index
    %4 = vector.load %arg4[%c0_5, %c0_6] : memref<32x4xf32, #tpu.memory_space<vmem>>, vector<32x4xf32>
    %5 = vector.extract_strided_slice %4 {offsets = [0, 0], sizes = [32, 1], strides = [1, 1]} : vector<32x4xf32> to vector<32x1xf32>
    %6 = vector.extract_strided_slice %4 {offsets = [0, 1], sizes = [32, 1], strides = [1, 1]} : vector<32x4xf32> to vector<32x1xf32>
    %7 = vector.extract_strided_slice %4 {offsets = [0, 2], sizes = [32, 1], strides = [1, 1]} : vector<32x4xf32> to vector<32x1xf32>
    %8 = vector.extract_strided_slice %4 {offsets = [0, 3], sizes = [1, 1], strides = [1, 1]} : vector<32x4xf32> to vector<1x1xf32>
    %cst = arith.constant dense<0.000000e+00> : vector<32x128xf32>
    %9 = tpu.matmul %2, %1, %cst {dimension_numbers = #tpu.dot_dimension_numbers<[1], [1], [0], [0], [0, 0, 1, 0], [], []>} : vector<32x16xbf16>, vector<128x16xbf16>, vector<32x128xf32> -> vector<32x128xf32>
    %10 = vector.broadcast %6 : vector<32x1xf32> to vector<32x128xf32>
    %11 = arith.addf %9, %10 : vector<32x128xf32>
    %cst_7 = arith.constant 0.000000e+00 : f32
    %12 = vector.broadcast %cst_7 : f32 to vector<32x128xf32>
    %13 = arith.maximumf %11, %12 : vector<32x128xf32>
    %14 = arith.truncf %13 : vector<32x128xf32> to vector<32x128xbf16>
    %cst_8 = arith.constant dense<0.000000e+00> : vector<32x128xf32>
    %15 = tpu.matmul %3, %14, %cst_8 {dimension_numbers = #tpu.dot_dimension_numbers<[1], [0], [0], [1], [0, 0, 1, 1], [], []>} : vector<32x32xbf16>, vector<32x128xbf16>, vector<32x128xf32> -> vector<32x128xf32>
    %16 = vector.broadcast %7 : vector<32x1xf32> to vector<32x128xf32>
    %17 = arith.addf %15, %16 : vector<32x128xf32>
    %cst_9 = arith.constant 0.000000e+00 : f32
    %18 = vector.broadcast %cst_9 : f32 to vector<32x128xf32>
    %19 = arith.maximumf %17, %18 : vector<32x128xf32>
    %20 = vector.broadcast %5 : vector<32x1xf32> to vector<32x128xf32>
    %21 = arith.mulf %19, %20 : vector<32x128xf32>
    %cst_10 = arith.constant dense<0.000000e+00> : vector<128xf32>
    %22 = vector.multi_reduction <add>, %21, %cst_10 [0] : vector<32x128xf32> to vector<128xf32>
    %23 = vector.shape_cast %22 : vector<128xf32> to vector<1x128xf32>
    %24 = vector.broadcast %8 : vector<1x1xf32> to vector<1x128xf32>
    %25 = arith.addf %23, %24 : vector<1x128xf32>
    %26 = arith.negf %25 : vector<1x128xf32>
    %27 = math.exp %26 : vector<1x128xf32>
    %cst_11 = arith.constant 1.000000e+00 : f32
    %28 = vector.broadcast %cst_11 : f32 to vector<1x128xf32>
    %29 = arith.addf %28, %27 : vector<1x128xf32>
    %30 = arith.divf %28, %29 : vector<1x128xf32>
    %c0_12 = arith.constant 0 : index
    %c0_13 = arith.constant 0 : index
    %31 = vector.load %arg5[%c0_12, %c0_13] : memref<1x128xf32, #tpu.memory_space<vmem>>, vector<1x128xf32>
    tpu.vector_store %arg5[%c0_12, %c0_13], %30 {strides = array<i32>} : memref<1x128xf32, #tpu.memory_space<vmem>>, vector<1x128xf32>,
    return
  }
  func.func @transform_0(%arg0: i32) -> (i32, i32) {
    %c0_i32 = arith.constant 0 : i32
    %c0_i32_0 = arith.constant 0 : i32
    return %arg0, %c0_i32 : i32, i32
  }
  func.func @transform_1(%arg0: i32) -> (i32, i32) {
    %c0_i32 = arith.constant 0 : i32
    %c0_i32_0 = arith.constant 0 : i32
    %c0_i32_1 = arith.constant 0 : i32
    return %c0_i32, %c0_i32_0 : i32, i32
  }
  func.func @transform_2(%arg0: i32) -> (i32, i32) {
    %c0_i32 = arith.constant 0 : i32
    %c0_i32_0 = arith.constant 0 : i32
    %c0_i32_1 = arith.constant 0 : i32
    return %c0_i32, %c0_i32_0 : i32, i32
  }
  func.func @transform_3(%arg0: i32) -> (i32, i32) {
    %c0_i32 = arith.constant 0 : i32
    %c0_i32_0 = arith.constant 0 : i32
    %c0_i32_1 = arith.constant 0 : i32
    return %c0_i32, %c0_i32_0 : i32, i32
  }
  func.func @transform_4(%arg0: i32) -> (i32, i32) {
    %c0_i32 = arith.constant 0 : i32
    %c0_i32_0 = arith.constant 0 : i32
    return %c0_i32, %arg0 : i32, i32
  }
}

</mosaic_0001>

<llo_original>
// kernel: tpu_custom_call.1
$region0: #{tpu_custom_call.1}
  #allocation0 [shape = 'u32[]', space=smem, size = 0x4, offset = 0x4, fixed_abs, tag = 'smem constant byte address 0x4 - core index']
  #allocation1 [shape = 'u32[144,128]{1,0:T(1,128)}', space=vmem, size = 0x12000, scoped, tag = 'internal scratch']
  %s0 = inlined_call_operand.vmem [shape: f32[128,16], index: 0, kind: input, shape index: {}]
  %s1 = inlined_call_operand.vmem [shape: bf16[32,16], index: 1, kind: input, shape index: {}]
  %s2 = inlined_call_operand.vmem [shape: bf16[32,32], index: 2, kind: input, shape index: {}]
  %s3 = inlined_call_operand.vmem [shape: f32[32,4], index: 3, kind: input, shape index: {}]
  %s4 = inlined_call_operand.hbm [shape: f32[1,128], index: 4, kind: output, shape index: {}]
  %s5 = sld [smem:[#allocation0]]
  $region26: #{tpu_custom_call.1} parent=0
    _
  %s7 = ssub.s32 1, %s5
  %s8 = scalar_select 0, %s7, %s5
  $region1: #{tpu_custom_call.1} parent=0
    #allocation2 [shape = 'u8[512]{0}', space=vmem, size = 0x400, scoped, tag = 'output window, operand 0, single buffered']
    #allocation3 [shape = 's32[1]{0}', space=sflag, size = 0x4, scoped, tag = 'scoped memory for tpu_custom_call.1']
    %9 = vsyncpa [#allocation3], 0
    // Predicated region
    $region2: #{tpu_custom_call.1} parent=1 // pred_check
      _
    $region3: #{tpu_custom_call.1} parent=1 // pred_check_branch
      %11 = sbr.rel (0) target = $region5
    $region4: #{tpu_custom_call.1} parent=1 // pred_region
      _
    $region5: #{tpu_custom_call.1} parent=1 // pred_fallthru
      _
    // Predicated region
    $region6: #{tpu_custom_call.1} parent=1 // pred_check
      _
    $region7: #{tpu_custom_call.1} parent=1 // pred_check_branch
      %13 = sbr.rel (0) target = $region9
    $region8: #{tpu_custom_call.1} parent=1 // pred_region
      _
    $region9: #{tpu_custom_call.1} parent=1 // pred_fallthru
      _
    // Predicated region
    $region10: #{tpu_custom_call.1} parent=1 // pred_check
      _
    $region11: #{tpu_custom_call.1} parent=1 // pred_check_branch
      %15 = sbr.rel (0) target = $region13
    $region12: #{tpu_custom_call.1} parent=1 // pred_region
      _
    $region13: #{tpu_custom_call.1} parent=1 // pred_fallthru
      _
    // Predicated region
    $region14: #{tpu_custom_call.1} parent=1 // pred_check
      _
    $region15: #{tpu_custom_call.1} parent=1 // pred_check_branch
      %17 = sbr.rel (0) target = $region17
    $region16: #{tpu_custom_call.1} parent=1 // pred_region
      _
    $region17: #{tpu_custom_call.1} parent=1 // pred_fallthru
      _
    %v19 = vld [vmem:[%s0] sm:$0xff]
    %v20 = vld [vmem:[%s0 + $0x8] sm:$0xff]
    %v21 = vld [vmem:[%s0 + $0x10] sm:$0xff]
    %v22 = vld [vmem:[%s0 + $0x18] sm:$0xff]
    %v23 = vld [vmem:[%s0 + $0x20] sm:$0xff]
    %v24 = vld [vmem:[%s0 + $0x28] sm:$0xff]
    %v25 = vld [vmem:[%s0 + $0x30] sm:$0xff]
    %v26 = vld [vmem:[%s0 + $0x38] sm:$0xff]
    %v27 = vld [vmem:[%s0 + $0x40] sm:$0xff]
    %v28 = vld [vmem:[%s0 + $0x48] sm:$0xff]
    %v29 = vld [vmem:[%s0 + $0x50] sm:$0xff]
    %v30 = vld [vmem:[%s0 + $0x58] sm:$0xff]
    %v31 = vld [vmem:[%s0 + $0x60] sm:$0xff]
    %v32 = vld [vmem:[%s0 + $0x68] sm:$0xff]
    %v33 = vld [vmem:[%s0 + $0x70] sm:$0xff]
    %v34 = vld [vmem:[%s0 + $0x78] sm:$0xff]
    %v35 = vpack.c.bf16 %v20, %v19
    %v36 = vpack.c.bf16 %v22, %v21
    %v37 = vpack.c.bf16 %v24, %v23
    %v38 = vpack.c.bf16 %v26, %v25
    %v39 = vpack.c.bf16 %v28, %v27
    %v40 = vpack.c.bf16 %v30, %v29
    %v41 = vpack.c.bf16 %v32, %v31
    %v42 = vpack.c.bf16 %v34, %v33
    %v43 = vld [vmem:[%s1] sm:$0xf]
    %v44 = vld [vmem:[%s1 + $0x4] sm:$0xf]
    %v45 = vld [vmem:[%s1 + $0x8] sm:$0xf]
    %v46 = vld [vmem:[%s1 + $0xc] sm:$0xf]
    %v47 = vld [vmem:[%s2] sm:$0xf]
    %v48 = vld [vmem:[%s2 + $0x4] sm:$0xf]
    %v49 = vld [vmem:[%s2 + $0x8] sm:$0xf]
    %v50 = vld [vmem:[%s2 + $0xc] sm:$0xf]
    %v51 = vld [vmem:[%s3] sm:$0xff]
    %v52 = vld [vmem:[%s3 + $0x8] sm:$0xff]
    %v53 = vld [vmem:[%s3 + $0x10] sm:$0xff]
    %v54 = vld [vmem:[%s3 + $0x18] sm:$0xff]
    %56 = vset.pattern.permute.xlu0 1
    %57 = vperm.xlu0 %56, %v51
    %v58 = vpop.permute.xlu0 %57
    %61 = vset.pattern.permute.xlu0 1
    %62 = vperm.xlu0 %61, %v52
    %v63 = vpop.permute.xlu0 %62
    %66 = vset.pattern.permute.xlu0 1
    %67 = vperm.xlu0 %66, %v53
    %v68 = vpop.permute.xlu0 %67
    %71 = vset.pattern.permute.xlu0 1
    %72 = vperm.xlu0 %71, %v54
    %v73 = vpop.permute.xlu0 %72
    %v79 = vunpack.c.l.b16 %v43
    %v80 = vunpack.c.l.b16 %v44
    %v81 = vunpack.c.l.b16 %v45
    %v82 = vunpack.c.l.b16 %v46
    %v83 = vpack.c.b16 %v80, %v79
    %v84 = vpack.c.b16 %v82, %v81
    %vm85 = vcmask 130048
    %v87 = vsel %vm85, %v83, 0
    %v90 = vsel %vm85, %v84, 0
    %v93 = vsel %vm85, %v35, 0
    %v96 = vsel %vm85, %v36, 0
    %v99 = vsel %vm85, %v37, 0
    %v102 = vsel %vm85, %v38, 0
    %v105 = vsel %vm85, %v39, 0
    %v108 = vsel %vm85, %v40, 0
    %v111 = vsel %vm85, %v41, 0
    %v114 = vsel %vm85, %v42, 0
    %116 = vmatprep.subr.bf16.mxu0 0
    %117 = vmatpush1.bf16.xpose.msra.mxu0 %v93
    %118 = vmatprep.subr.bf16.mxu0 0
    %119 = vmatpush1.bf16.xpose.msra.mxu0 %v96
    %120 = vmatprep.subr.bf16.mxu0 0
    %121 = vmatpush1.bf16.xpose.msra.mxu0 %v99
    %122 = vmatprep.subr.bf16.mxu0 0
    %123 = vmatpush1.bf16.xpose.msra.mxu0 %v102
    %124 = vmatprep.subr.bf16.mxu0 0
    %125 = vmatpush1.bf16.xpose.msra.mxu0 %v105
    %126 = vmatprep.subr.bf16.mxu0 0
    %127 = vmatpush1.bf16.xpose.msra.mxu0 %v108
    %128 = vmatprep.subr.bf16.mxu0 0
    %129 = vmatpush1.bf16.xpose.msra.mxu0 %v111
    %130 = vmatprep.subr.bf16.mxu0 0
    %131 = vmatpush1.bf16.xpose.msra.mxu0 %v114
    %132 = vmatprep.subr.bf16.mxu0 0
    %133 = vmatpush1.bf16.xpose.msra.mxu0 0
    %134 = vmatprep.subr.bf16.mxu0 0
    %135 = vmatpush1.bf16.xpose.msra.mxu0 0
    %136 = vmatprep.subr.bf16.mxu0 0
    %137 = vmatpush1.bf16.xpose.msra.mxu0 0
    %138 = vmatprep.subr.bf16.mxu0 0
    %139 = vmatpush1.bf16.xpose.msra.mxu0 0
    %140 = vmatprep.subr.bf16.mxu0 0
    %141 = vmatpush1.bf16.xpose.msra.mxu0 0
    %142 = vmatprep.subr.bf16.mxu0 0
    %143 = vmatpush1.bf16.xpose.msra.mxu0 0
    %144 = vmatprep.subr.bf16.mxu0 0
    %145 = vmatpush1.bf16.xpose.msra.mxu0 0
    %146 = vmatprep.subr.bf16.mxu0 0
    %147 = vmatpush1.bf16.xpose.msra.mxu0 0
    %148 = vmatprep.mubr.bf16.mxu0 0
    %149 = vmatmul.mubr.bf16.gmra.mrb[0].mxu0 %v87
    %v150 = vpop.f32.mrb[0].mxu0
    %v151 = vadd.f32 %v58, %v150
    %v152 = vpop.f32.mrb[0].mxu0
    %v153 = vpop.f32.mrb[0].mxu0
    %v154 = vadd.f32 %v63, %v153
    %v155 = vpop.f32.mrb[0].mxu0
    %156 = vmatprep.mubr.bf16.mxu0 0
    %157 = vmatmul.mubr.bf16.gmra.mrb[0].mxu0 %v90
    %v158 = vpop.f32.mrb[0].mxu0
    %v159 = vadd.f32 %v68, %v158
    %v160 = vpop.f32.mrb[0].mxu0
    %v161 = vpop.f32.mrb[0].mxu0
    %v162 = vadd.f32 %v73, %v161
    %v163 = vpop.f32.mrb[0].mxu0
    %164 = vdwg.mxu0
    %v165 = vmax.f32 %v151, 0.0
    %v166 = vmax.f32 %v154, 0.0
    %v167 = vmax.f32 %v159, 0.0
    %v168 = vmax.f32 %v162, 0.0
    %v169 = vpack.c.bf16 %v166, %v165
    %v170 = vpack.c.bf16 %v168, %v167
    %171 = vset.pattern.permute.xlu0 2
    %172 = vperm.xlu0 %171, %v51
    %v173 = vpop.permute.xlu0 %172
    %175 = vset.pattern.permute.xlu0 2
    %176 = vperm.xlu0 %175, %v52
    %v177 = vpop.permute.xlu0 %176
    %179 = vset.pattern.permute.xlu0 2
    %180 = vperm.xlu0 %179, %v53
    %v181 = vpop.permute.xlu0 %180
    %183 = vset.pattern.permute.xlu0 2
    %184 = vperm.xlu0 %183, %v54
    %v185 = vpop.permute.xlu0 %184
    %v191 = vunpack.c.l.b16 %v47
    %v192 = vunpack.c.l.b16 %v48
    %v193 = vunpack.c.l.b16 %v49
    %v194 = vunpack.c.l.b16 %v50
    %v195 = vpack.c.b16 %v192, %v191
    %v196 = vpack.c.b16 %v194, %v193
    %vm197 = vcmask 261120
    %v199 = vsel %vm197, %v195, 0
    %v202 = vsel %vm197, %v196, 0
    %204 = vmatprep.subr.bf16.mxu0 0
    %205 = vmatpush1.bf16.msra.mxu0 %v169
    %206 = vmatprep.subr.bf16.mxu0 0
    %207 = vmatpush1.bf16.msra.mxu0 %v170
    %208 = vmatprep.subr.bf16.mxu0 0
    %209 = vmatpush1.bf16.msra.mxu0 0
    %210 = vmatprep.subr.bf16.mxu0 0
    %211 = vmatpush1.bf16.msra.mxu0 0
    %212 = vmatprep.subr.bf16.mxu0 0
    %213 = vmatpush1.bf16.msra.mxu0 0
    %214 = vmatprep.subr.bf16.mxu0 0
    %215 = vmatpush1.bf16.msra.mxu0 0
    %216 = vmatprep.subr.bf16.mxu0 0
    %217 = vmatpush1.bf16.msra.mxu0 0
    %218 = vmatprep.subr.bf16.mxu0 0
    %219 = vmatpush1.bf16.msra.mxu0 0
    %220 = vmatprep.subr.bf16.mxu0 0
    %221 = vmatpush1.bf16.msra.mxu0 0
    %222 = vmatprep.subr.bf16.mxu0 0
    %223 = vmatpush1.bf16.msra.mxu0 0
    %224 = vmatprep.subr.bf16.mxu0 0
    %225 = vmatpush1.bf16.msra.mxu0 0
    %226 = vmatprep.subr.bf16.mxu0 0
    %227 = vmatpush1.bf16.msra.mxu0 0
    %228 = vmatprep.subr.bf16.mxu0 0
    %229 = vmatpush1.bf16.msra.mxu0 0
    %230 = vmatprep.subr.bf16.mxu0 0
    %231 = vmatpush1.bf16.msra.mxu0 0
    %232 = vmatprep.subr.bf16.mxu0 0
    %233 = vmatpush1.bf16.msra.mxu0 0
    %234 = vmatprep.subr.bf16.mxu0 0
    %235 = vmatpush1.bf16.msra.mxu0 0
    %236 = vmatprep.mubr.bf16.mxu0 0
    %237 = vmatmul.mubr.bf16.gmra.mrb[0].mxu0 %v199
    %v238 = vpop.f32.mrb[0].mxu0
    %v239 = vadd.f32 %v173, %v238
    %v240 = vpop.f32.mrb[0].mxu0
    %v241 = vpop.f32.mrb[0].mxu0
    %v242 = vadd.f32 %v177, %v241
    %v243 = vpop.f32.mrb[0].mxu0
    %244 = vmatprep.mubr.bf16.mxu0 0
    %245 = vmatmul.mubr.bf16.gmra.mrb[0].mxu0 %v202
    %v246 = vpop.f32.mrb[0].mxu0
    %v247 = vadd.f32 %v181, %v246
    %v248 = vpop.f32.mrb[0].mxu0
    %v249 = vpop.f32.mrb[0].mxu0
    %v250 = vadd.f32 %v185, %v249
    %v251 = vpop.f32.mrb[0].mxu0
    %252 = vdwg.mxu0
    %v253 = vmax.f32 %v239, 0.0
    %v254 = vmax.f32 %v242, 0.0
    %v255 = vmax.f32 %v247, 0.0
    %v256 = vmax.f32 %v250, 0.0
    %257 = vset.pattern.permute.xlu0 0
    %258 = vperm.xlu0 %257, %v51
    %v259 = vpop.permute.xlu0 %258
    %261 = vset.pattern.permute.xlu0 0
    %262 = vperm.xlu0 %261, %v52
    %v263 = vpop.permute.xlu0 %262
    %265 = vset.pattern.permute.xlu0 0
    %266 = vperm.xlu0 %265, %v53
    %v267 = vpop.permute.xlu0 %266
    %269 = vset.pattern.permute.xlu0 0
    %270 = vperm.xlu0 %269, %v54
    %v271 = vpop.permute.xlu0 %270
    %v273 = vmul.f32 %v253, %v259
    %v274 = vmul.f32 %v254, %v263
    %v275 = vmul.f32 %v255, %v267
    %v276 = vmul.f32 %v256, %v271
    %v277 = vadd.f32 %v273, %v274
    %v278 = vadd.f32 %v277, %v275
    %v279 = vadd.f32 %v278, %v276
    %v280 = vrot.slane %v279, 4
    %v281 = vadd.f32 %v279, %v280
    %v282 = vrot.slane %v281, 2
    %v283 = vadd.f32 %v281, %v282
    %v284 = vrot.slane %v283, 1
    %v285 = vadd.f32 %v283, %v284
    %286 = vset.pattern.permute.xlu0 3
    %287 = vperm.xlu0 %286, %v51
    %v288 = vpop.permute.xlu0 %287
    %v290 = vadd.f32 %v285, %v288
    %v291 = vxor.u32 %v290, 2147483648
    %v292 = vmul.f32 %v291, 1.442695
    %v293 = vpow.pop %v292
    %v294 = vadd.f32 %v293, 1.0
    %v295 = vrcp.pop %v294
    %v296 = vmul.f32 1.0, %v295
    %297 = vst [vmem:[#allocation2] sm:$0x1] %v296
    // Predicated region
    $region18: #{tpu_custom_call.1} parent=1 // pred_check
      _
    $region19: #{tpu_custom_call.1} parent=1 // pred_check_branch
      %299 = sbr.rel (0) target = $region21
    $region20: #{tpu_custom_call.1} parent=1 // pred_region
      %s301 = ssub.s32 16, 16
      %302 = vsyncadd [#allocation3], %s301
      %s304 = sshll.u32 [#allocation2], 4
      %s305 = int_to_ptr.vmem [resolvable:$true] %s304
      %307 = dma.vmem_to_hbm [thread:$0]  %s305, 16, %s4, [#allocation3]
    $region21: #{tpu_custom_call.1} parent=1 // pred_fallthru
      _
    // Predicated region
    $region22: #{tpu_custom_call.1} parent=1 // pred_check
      _
    $region23: #{tpu_custom_call.1} parent=1 // pred_check_branch
      %309 = sbr.rel (0) target = $region25
    $region24: #{tpu_custom_call.1} parent=1 // pred_region
      %310 = dma.done [#allocation3], 16
    $region25: #{tpu_custom_call.1} parent=1 // pred_fallthru
      _
    %311 = vsyncpa [#allocation3], 1

</llo_original>
